<compile_context>
chip_gen: v7x
topology: tpu7x:2x2x1
jax: 0.10.0
libtpu: 0.0.40
codegen_flags: <defaults>
</compile_context>

<pallas_src>
import functools
import math

import jax
import jax.numpy as jnp
from jax.experimental import pallas as pl
from jax.experimental.pallas import tpu as pltpu


def _row_softmax(x, subtract_max=True):
    """Softmax over the last axis (torch F.softmax(dim=1)).

    `subtract_max=False` drops the cross-lane max reduce when the inputs are
    known to be bounded (second softmax: inputs in [0, 1])."""
    if subtract_max:
        x = x - jnp.max(x, axis=-1, keepdims=True)
    e = jnp.exp(x)
    s = jnp.sum(e, axis=-1, keepdims=True)
    # EUP approximate reciprocal instead of a VALU division.
    return e * pl.reciprocal(s, approx=True)


def mem_module_kernel(z_ref, mem_ref, mem_t_ref, att_ref, zhat_ref):
    z = z_ref[...]            # [TB, C]  (f32, or bf16 when use_bf16_matmul)
    mem = mem_ref[...]        # [M,  C]
    mem_t = mem_t_ref[...]    # [C,  M]  pre-transposed copy -> no in-kernel .T

    # --- w = z @ memory.T  ->  [TB, M]; lane-dense output, f32 accumulation ---
    w = jnp.dot(z, mem_t, preferred_element_type=jnp.float32)

    # --- softmax over memory slots (logits unbounded -> keep max subtraction) ---
    w = _row_softmax(w, subtract_max=True)

    # --- hard_shrink_relu(w, lambd=2/M): threshold form (cmp + select).
    #     Equivalent to relu(w-l)*w/(|w-l|+eps) up to O(eps=1e-12). ---
    lambd = jnp.float32(2.0 / w.shape[-1])
    w_hat = jnp.where(w > lambd, w, jnp.float32(0.0))

    # --- second softmax -> attention weights (w_hat in [0,1], skip the max) ---
    att = _row_softmax(w_hat, subtract_max=False)

    # --- z_hat = att @ memory  ->  [TB, C] ---
    att_mm = att if att.dtype == mem.dtype else att.astype(mem.dtype)
    z_hat = jnp.dot(att_mm, mem, preferred_element_type=jnp.float32)

    # Only cast when dtypes actually differ (avoid no-op casts / vreg copies).
    att_ref[...] = att if att.dtype == att_ref.dtype else att.astype(att_ref.dtype)
    zhat_ref[...] = (z_hat if z_hat.dtype == zhat_ref.dtype
                     else z_hat.astype(zhat_ref.dtype))


def _round_up(x, m):
    return ((x + m - 1) // m) * m


def _pick_batch_tile(batch, C, M, in_itemsize, budget_bytes=24 << 20,
                     max_tile=1024):
    """Largest multiple-of-8 batch tile whose per-grid-step VMEM footprint
    fits `budget_bytes`, split into >=2 (nearly even) tiles when the batch is
    large enough so both v7x TensorCores get work."""
    bank_bytes = 2 * M * C * in_itemsize                 # bank + transpose, single-buffered
    per_row = 2 * (C * in_itemsize + (M + C) * 4)        # z (double-buffered) + att/z_hat outs
    fit = max((budget_bytes - bank_bytes) // max(per_row, 1), 8)
    max_tb = max(8, min(max_tile, (fit // 8) * 8))
    if batch < 16:
        # Full-extent block (always legal) unless the budget forces tiling.
        return batch if batch <= max_tb else max_tb
    n_tiles = max(pl.cdiv(batch, max_tb), 2)             # even-ish tiles, >=2 steps
    tb = _round_up(pl.cdiv(batch, n_tiles), 8)
    return max(8, min(tb, max_tb))


def _vmem_limit_bytes(tb, C, M, in_itemsize):
    """Explicit scoped-VMEM limit: estimated footprint + headroom, clamped to
    [32 MiB, 48 MiB] (raises v5e's 16 MiB default, stays under v7x's 64 MiB)."""
    est = (2 * tb * C * in_itemsize        # z, double-buffered
           + 2 * tb * (M + C) * 4          # att + z_hat outputs, double-buffered
           + 2 * M * C * in_itemsize)      # bank + transposed copy, single-buffered
    return int(min(max(est + (4 << 20), 32 << 20), 48 << 20))


def _bank_spec(shape):
    """Resident (constant index_map) bank spec, single-buffered when the
    pipeline_mode knob is available."""
    try:
        return pl.BlockSpec(shape, lambda i: (0, 0), pipeline_mode=pl.Buffered(1))
    except TypeError:  # older Pallas without pipeline_mode on BlockSpec
        return pl.BlockSpec(shape, lambda i: (0, 0))


@functools.partial(jax.jit, static_argnames=("block_b", "use_bf16_matmul"))
def mem_module_forward(z, memory, memory_t=None, *, block_b=None,
                       use_bf16_matmul=False):
    """MemModule forward.  z: [B, C] f32, memory: [M, C] f32,
    memory_t: optional precomputed [C, M] transposed bank (pass it to avoid a
    per-call transpose).  Returns (att [B, M] f32, z_hat [B, C] f32)."""
    B, C = z.shape
    M, C2 = memory.shape
    assert C == C2, "feature_dim mismatch"

    mem_t = memory.T if memory_t is None else memory_t

    if use_bf16_matmul:
        # bf16 MXU operands, f32 accumulation; elementwise math stays f32.
        z_in = z.astype(jnp.bfloat16)
        mem_in = memory.astype(jnp.bfloat16)
        mem_t_in = mem_t.astype(jnp.bfloat16)
        in_bytes = 2
    else:
        z_in, mem_in, mem_t_in = z, memory, mem_t
        in_bytes = 4

    tb = _pick_batch_tile(B, C, M, in_bytes) if block_b is None else block_b
    grid = (pl.cdiv(B, tb),)

    out_shapes = (
        jax.ShapeDtypeStruct((B, M), jnp.float32),
        jax.ShapeDtypeStruct((B, C), jnp.float32),
    )

    cost = pl.CostEstimate(
        flops=4 * B * M * C,                      # two [B,C]x[C,M]-sized matmuls
        transcendentals=2 * B * M + 2 * B,        # exps + approx reciprocals
        bytes_accessed=(B * C + 2 * M * C) * in_bytes + (B * M + B * C) * 4,
    )

    return pl.pallas_call(
        mem_module_kernel,
        out_shape=out_shapes,
        grid=grid,
        in_specs=[
            pl.BlockSpec((tb, C), lambda i: (i, 0)),   # z: batch-tiled
            _bank_spec((M, C)),                        # memory: VMEM-resident
            _bank_spec((C, M)),                        # memory.T: VMEM-resident
        ],
        out_specs=(
            pl.BlockSpec((tb, M), lambda i: (i, 0)),   # att
            pl.BlockSpec((tb, C), lambda i: (i, 0)),   # z_hat
        ),
        compiler_params=pltpu.CompilerParams(
            dimension_semantics=("parallel",),         # batch shards across TCs (v7x)
            vmem_limit_bytes=_vmem_limit_bytes(tb, C, M, in_bytes),
        ),
        cost_estimate=cost,
    )(z_in, mem_in, mem_t_in)


def init_memory(key, mem_dim, feature_dim):
    # Matches reset_parameters(): uniform(-stdv, stdv), stdv = 1/sqrt(feature_dim)
    stdv = 1.0 / math.sqrt(feature_dim)
    return jax.random.uniform(
        key, (mem_dim, feature_dim), dtype=jnp.float32, minval=-stdv, maxval=stdv
    )


def reference_forward(z, memory):
    # Pure-JAX reference (exact divisions) for sanity checking.
    w = z @ memory.T
    w = jax.nn.softmax(w, axis=1)
    n = w.shape[1]
    lambd = 2.0 / n
    eps = 1e-12
    w_hat = jnp.maximum(w - lambd, 0.0) * w / (jnp.abs(w - lambd) + eps)
    att = jax.nn.softmax(w_hat, axis=1)
    z_hat = att @ memory
    return att, z_hat


if __name__ == "__main__":
    key = jax.random.PRNGKey(0)
    k_mem, k_z = jax.random.split(key)

    B = 8             # batch
    feature_dim = 32  # C (latent code dim)
    mem_dim = 128     # M (number of memory slots)

    memory = init_memory(k_mem, mem_dim, feature_dim)
    memory_t = jnp.asarray(memory.T)   # hoisted one-time transposed copy
    z = jax.random.normal(k_z, (B, feature_dim), dtype=jnp.float32)

    att, z_hat = mem_module_forward(z, memory, memory_t)
    att = jax.block_until_ready(att)
    z_hat = jax.block_until_ready(z_hat)

    att_ref, z_hat_ref = reference_forward(z, memory)
    # Kernel uses EUP approximate reciprocals for the softmax denominators and
    # the threshold form of hard-shrink, so compare at a slightly looser tol.
    assert jnp.allclose(att, att_ref, atol=2e-3, rtol=2e-3), \
        float(jnp.max(jnp.abs(att - att_ref)))
    assert jnp.allclose(z_hat, z_hat_ref, atol=2e-3, rtol=2e-3), \
        float(jnp.max(jnp.abs(z_hat - z_hat_ref)))

    # Second check: multi-tile grid + ragged last batch tile (B=24 -> tb=16).
    B2 = 24
    z2 = jax.random.normal(jax.random.PRNGKey(1), (B2, feature_dim),
                           dtype=jnp.float32)
    att2, z_hat2 = mem_module_forward(z2, memory, memory_t)
    att2 = jax.block_until_ready(att2)
    z_hat2 = jax.block_until_ready(z_hat2)
    att2_ref, z_hat2_ref = reference_forward(z2, memory)
    assert jnp.allclose(att2, att2_ref, atol=2e-3, rtol=2e-3), \
        float(jnp.max(jnp.abs(att2 - att2_ref)))
    assert jnp.allclose(z_hat2, z_hat2_ref, atol=2e-3, rtol=2e-3), \
        float(jnp.max(jnp.abs(z_hat2 - z_hat2_ref)))

    print("KERNEL_OK")
</pallas_src>

<mosaic_0001>
module attributes {stable_mosaic.version = 11 : i64} {
  func.func @mem_module_kernel(%arg0: i32, %arg1: memref<8x32xf32, #tpu.memory_space<vmem>>, %arg2: memref<128x32xf32, #tpu.memory_space<vmem>>, %arg3: memref<32x128xf32, #tpu.memory_space<vmem>>, %arg4: memref<8x128xf32, #tpu.memory_space<vmem>>, %arg5: memref<8x32xf32, #tpu.memory_space<vmem>>) attributes {dimension_semantics = [#tpu.dimension_semantics<parallel>], iteration_bounds = array<i64: 1>, scalar_prefetch = 0 : i64, scratch_operands = 0 : i64, tpu.core_type = #tpu.core_type<tc>, window_params = [{transform_indices = @transform_0, window_bounds = array<i64: 8, 32>}, {pipeline_mode = #tpu.pipeline_mode<synchronous>, transform_indices = @transform_1, window_bounds = array<i64: 128, 32>}, {pipeline_mode = #tpu.pipeline_mode<synchronous>, transform_indices = @transform_2, window_bounds = array<i64: 32, 128>}, {transform_indices = @transform_3, window_bounds = array<i64: 8, 128>}, {transform_indices = @transform_4, window_bounds = array<i64: 8, 32>}]} {
    %c0 = arith.constant 0 : index
    %c0_0 = arith.constant 0 : index
    %0 = vector.load %arg1[%c0, %c0_0] : memref<8x32xf32, #tpu.memory_space<vmem>>, vector<8x32xf32>
    %c0_1 = arith.constant 0 : index
    %c0_2 = arith.constant 0 : index
    %1 = vector.load %arg2[%c0_1, %c0_2] : memref<128x32xf32, #tpu.memory_space<vmem>>, vector<128x32xf32>
    %c0_3 = arith.constant 0 : index
    %c0_4 = arith.constant 0 : index
    %2 = vector.load %arg3[%c0_3, %c0_4] : memref<32x128xf32, #tpu.memory_space<vmem>>, vector<32x128xf32>
    %cst = arith.constant dense<0.000000e+00> : vector<8x128xf32>
    %3 = tpu.matmul %0, %2, %cst {dimension_numbers = #tpu.dot_dimension_numbers<[1], [0], [0], [1], [0, 0, 1, 1], [], []>} : vector<8x32xf32>, vector<32x128xf32>, vector<8x128xf32> -> vector<8x128xf32>
    %cst_5 = arith.constant dense<0xFF800000> : vector<8xf32>
    %4 = vector.multi_reduction <maximumf>, %3, %cst_5 [1] : vector<8x128xf32> to vector<8xf32>
    %5 = vector.shape_cast %4 : vector<8xf32> to vector<8x1xf32>
    %6 = vector.broadcast %5 : vector<8x1xf32> to vector<8x128xf32>
    %7 = arith.subf %3, %6 : vector<8x128xf32>
    %8 = math.exp %7 : vector<8x128xf32>
    %cst_6 = arith.constant dense<0.000000e+00> : vector<8xf32>
    %9 = vector.multi_reduction <add>, %8, %cst_6 [1] : vector<8x128xf32> to vector<8xf32>
    %10 = vector.shape_cast %9 : vector<8xf32> to vector<8x1xf32>
    %11 = tpu.reciprocal %10 {approx = true} : vector<8x1xf32> -> vector<8x1xf32>
    %12 = vector.broadcast %11 : vector<8x1xf32> to vector<8x128xf32>
    %13 = arith.mulf %8, %12 : vector<8x128xf32>
    %cst_7 = arith.constant 1.562500e-02 : f32
    %14 = vector.broadcast %cst_7 : f32 to vector<8x128xf32>
    %15 = arith.cmpf ogt, %13, %14 : vector<8x128xf32>
    %cst_8 = arith.constant 0.000000e+00 : f32
    %16 = vector.broadcast %cst_8 : f32 to vector<8x128xf32>
    %17 = arith.select %15, %13, %16 : vector<8x128xi1>, vector<8x128xf32>
    %18 = math.exp %17 : vector<8x128xf32>
    %cst_9 = arith.constant dense<0.000000e+00> : vector<8xf32>
    %19 = vector.multi_reduction <add>, %18, %cst_9 [1] : vector<8x128xf32> to vector<8xf32>
    %20 = vector.shape_cast %19 : vector<8xf32> to vector<8x1xf32>
    %21 = tpu.reciprocal %20 {approx = true} : vector<8x1xf32> -> vector<8x1xf32>
    %22 = vector.broadcast %21 : vector<8x1xf32> to vector<8x128xf32>
    %23 = arith.mulf %18, %22 : vector<8x128xf32>
    %cst_10 = arith.constant dense<0.000000e+00> : vector<8x32xf32>
    %24 = tpu.matmul %23, %1, %cst_10 {dimension_numbers = #tpu.dot_dimension_numbers<[1], [0], [0], [1], [0, 0, 1, 1], [], []>} : vector<8x128xf32>, vector<128x32xf32>, vector<8x32xf32> -> vector<8x32xf32>
    %c0_11 = arith.constant 0 : index
    %c0_12 = arith.constant 0 : index
    %25 = vector.load %arg4[%c0_11, %c0_12] : memref<8x128xf32, #tpu.memory_space<vmem>>, vector<8x128xf32>
    tpu.vector_store %arg4[%c0_11, %c0_12], %23 {strides = array<i32>} : memref<8x128xf32, #tpu.memory_space<vmem>>, vector<8x128xf32>,
    %c0_13 = arith.constant 0 : index
    %c0_14 = arith.constant 0 : index
    %26 = vector.load %arg5[%c0_13, %c0_14] : memref<8x32xf32, #tpu.memory_space<vmem>>, vector<8x32xf32>
    tpu.vector_store %arg5[%c0_13, %c0_14], %24 {strides = array<i32>} : memref<8x32xf32, #tpu.memory_space<vmem>>, vector<8x32xf32>,
    return
  }
  func.func @transform_0(%arg0: i32) -> (i32, i32) {
    %c0_i32 = arith.constant 0 : i32
    %c0_i32_0 = arith.constant 0 : i32
    return %arg0, %c0_i32 : i32, i32
  }
  func.func @transform_1(%arg0: i32) -> (i32, i32) {
    %c0_i32 = arith.constant 0 : i32
    %c0_i32_0 = arith.constant 0 : i32
    %c0_i32_1 = arith.constant 0 : i32
    return %c0_i32, %c0_i32_0 : i32, i32
  }
  func.func @transform_2(%arg0: i32) -> (i32, i32) {
    %c0_i32 = arith.constant 0 : i32
    %c0_i32_0 = arith.constant 0 : i32
    %c0_i32_1 = arith.constant 0 : i32
    return %c0_i32, %c0_i32_0 : i32, i32
  }
  func.func @transform_3(%arg0: i32) -> (i32, i32) {
    %c0_i32 = arith.constant 0 : i32
    %c0_i32_0 = arith.constant 0 : i32
    return %arg0, %c0_i32 : i32, i32
  }
  func.func @transform_4(%arg0: i32) -> (i32, i32) {
    %c0_i32 = arith.constant 0 : i32
    %c0_i32_0 = arith.constant 0 : i32
    return %arg0, %c0_i32 : i32, i32
  }
}

</mosaic_0001>

<llo_original>
// kernel: mem_module_forward.1
$region0: #{mem_module_forward.1}
  #allocation0 [shape = 'u32[]', space=smem, size = 0x4, offset = 0x4, fixed_abs, tag = 'smem constant byte address 0x4 - core index']
  #allocation1 [shape = 'u32[144,128]{1,0:T(1,128)}', space=vmem, size = 0x12000, scoped, tag = 'internal scratch']
  %s0 = inlined_call_operand.vmem [shape: f32[8,32], index: 0, kind: input, shape index: {}]
  %s1 = inlined_call_operand.vmem [shape: f32[128,32], index: 1, kind: input, shape index: {}]
  %s2 = inlined_call_operand.vmem [shape: f32[32,128], index: 2, kind: input, shape index: {}]
  %s3 = inlined_call_operand.hbm [shape: f32[8,128], index: 3, kind: output, shape index: {0}]
  %s4 = inlined_call_operand.hbm [shape: f32[8,32], index: 4, kind: output, shape index: {1}]
  %5 = xla_tuple %s3, %s4
  %s6 = sld [smem:[#allocation0]]
  $region30: #{mem_module_forward.1} parent=0
    _
  %s8 = ssub.s32 1, %s6
  %s9 = scalar_select 0, %s8, %s6
  $region1: #{mem_module_forward.1} parent=0
    #allocation2 [shape = 'u8[4096]{0}', space=vmem, size = 0x1000, scoped, tag = 'output window, operand 0, single buffered']
    #allocation3 [shape = 's32[1]{0}', space=sflag, size = 0x4, scoped, tag = 'scoped memory for mem_module_forward.1']
    #allocation4 [shape = 'u8[4096]{0}', space=vmem, size = 0x1000, scoped, tag = 'output window, operand 1, single buffered']
    #allocation5 [shape = 's32[1]{0}', space=sflag, size = 0x4, scoped, tag = 'scoped memory for mem_module_forward.1']
    %10 = vsyncpa [#allocation3], 0
    %11 = vsyncpa [#allocation5], 0
    // Predicated region
    $region2: #{mem_module_forward.1} parent=1 // pred_check
      _
    $region3: #{mem_module_forward.1} parent=1 // pred_check_branch
      %13 = sbr.rel (0) target = $region5
    $region4: #{mem_module_forward.1} parent=1 // pred_region
      _
    $region5: #{mem_module_forward.1} parent=1 // pred_fallthru
      _
    // Predicated region
    $region6: #{mem_module_forward.1} parent=1 // pred_check
      _
    $region7: #{mem_module_forward.1} parent=1 // pred_check_branch
      %15 = sbr.rel (0) target = $region9
    $region8: #{mem_module_forward.1} parent=1 // pred_region
      _
    $region9: #{mem_module_forward.1} parent=1 // pred_fallthru
      _
    // Predicated region
    $region10: #{mem_module_forward.1} parent=1 // pred_check
      _
    $region11: #{mem_module_forward.1} parent=1 // pred_check_branch
      %17 = sbr.rel (0) target = $region13
    $region12: #{mem_module_forward.1} parent=1 // pred_region
      _
    $region13: #{mem_module_forward.1} parent=1 // pred_fallthru
      _
    %v18 = vld [vmem:[%s0] sm:$0xff]
    %v19 = vld [vmem:[%s1] sm:$0xff]
    %v20 = vld [vmem:[%s1 + $0x8] sm:$0xff]
    %v21 = vld [vmem:[%s1 + $0x10] sm:$0xff]
    %v22 = vld [vmem:[%s1 + $0x18] sm:$0xff]
    %v23 = vld [vmem:[%s1 + $0x20] sm:$0xff]
    %v24 = vld [vmem:[%s1 + $0x28] sm:$0xff]
    %v25 = vld [vmem:[%s1 + $0x30] sm:$0xff]
    %v26 = vld [vmem:[%s1 + $0x38] sm:$0xff]
    %v27 = vld [vmem:[%s1 + $0x40] sm:$0xff]
    %v28 = vld [vmem:[%s1 + $0x48] sm:$0xff]
    %v29 = vld [vmem:[%s1 + $0x50] sm:$0xff]
    %v30 = vld [vmem:[%s1 + $0x58] sm:$0xff]
    %v31 = vld [vmem:[%s1 + $0x60] sm:$0xff]
    %v32 = vld [vmem:[%s1 + $0x68] sm:$0xff]
    %v33 = vld [vmem:[%s1 + $0x70] sm:$0xff]
    %v34 = vld [vmem:[%s1 + $0x78] sm:$0xff]
    %v35 = vld [vmem:[%s2] sm:$0xff]
    %v36 = vld [vmem:[%s2 + $0x8] sm:$0xff]
    %v37 = vld [vmem:[%s2 + $0x10] sm:$0xff]
    %v38 = vld [vmem:[%s2 + $0x18] sm:$0xff]
    %vm39 = vcmask 261120
    %v41 = vsel %vm39, %v18, 0
    %43 = vmatprep.subr.mxu0 0.0
    %44 = vmatpush1.msra.mxu0 %v35
    %45 = vmatprep.subr.mxu0 0.0
    %46 = vmatpush1.msra.mxu0 %v36
    %47 = vmatprep.subr.mxu0 0.0
    %48 = vmatpush1.msra.mxu0 %v37
    %49 = vmatprep.subr.mxu0 0.0
    %50 = vmatpush1.msra.mxu0 %v38
    %51 = vmatprep.subr.mxu0 0.0
    %52 = vmatpush1.msra.mxu0 0.0
    %53 = vmatprep.subr.mxu0 0.0
    %54 = vmatpush1.msra.mxu0 0.0
    %55 = vmatprep.subr.mxu0 0.0
    %56 = vmatpush1.msra.mxu0 0.0
    %57 = vmatprep.subr.mxu0 0.0
    %58 = vmatpush1.msra.mxu0 0.0
    %59 = vmatprep.subr.mxu0 0.0
    %60 = vmatpush1.msra.mxu0 0.0
    %61 = vmatprep.subr.mxu0 0.0
    %62 = vmatpush1.msra.mxu0 0.0
    %63 = vmatprep.subr.mxu0 0.0
    %64 = vmatpush1.msra.mxu0 0.0
    %65 = vmatprep.subr.mxu0 0.0
    %66 = vmatpush1.msra.mxu0 0.0
    %67 = vmatprep.subr.mxu0 0.0
    %68 = vmatpush1.msra.mxu0 0.0
    %69 = vmatprep.subr.mxu0 0.0
    %70 = vmatpush1.msra.mxu0 0.0
    %71 = vmatprep.subr.mxu0 0.0
    %72 = vmatpush1.msra.mxu0 0.0
    %73 = vmatprep.subr.mxu0 0.0
    %74 = vmatpush1.msra.mxu0 0.0
    %75 = vmatprep.subr.mxu0 0.0
    %76 = vmatpush1.msra.mxu0 0.0
    %77 = vmatprep.subr.mxu0 0.0
    %78 = vmatpush1.msra.mxu0 0.0
    %79 = vmatprep.subr.mxu0 0.0
    %80 = vmatpush1.msra.mxu0 0.0
    %81 = vmatprep.subr.mxu0 0.0
    %82 = vmatpush1.msra.mxu0 0.0
    %83 = vmatprep.subr.mxu0 0.0
    %84 = vmatpush1.msra.mxu0 0.0
    %85 = vmatprep.subr.mxu0 0.0
    %86 = vmatpush1.msra.mxu0 0.0
    %87 = vmatprep.subr.mxu0 0.0
    %88 = vmatpush1.msra.mxu0 0.0
    %89 = vmatprep.subr.mxu0 0.0
    %90 = vmatpush1.msra.mxu0 0.0
    %91 = vmatprep.subr.mxu0 0.0
    %92 = vmatpush1.msra.mxu0 0.0
    %93 = vmatprep.subr.mxu0 0.0
    %94 = vmatpush1.msra.mxu0 0.0
    %95 = vmatprep.subr.mxu0 0.0
    %96 = vmatpush1.msra.mxu0 0.0
    %97 = vmatprep.subr.mxu0 0.0
    %98 = vmatpush1.msra.mxu0 0.0
    %99 = vmatprep.subr.mxu0 0.0
    %100 = vmatpush1.msra.mxu0 0.0
    %101 = vmatprep.subr.mxu0 0.0
    %102 = vmatpush1.msra.mxu0 0.0
    %103 = vmatprep.subr.mxu0 0.0
    %104 = vmatpush1.msra.mxu0 0.0
    %105 = vmatprep.subr.mxu0 0.0
    %106 = vmatpush1.msra.mxu0 0.0
    %107 = vmatprep.mubr.f32.mxu0 0.0
    %108 = vmatmul.mubr.f32.gmra.mrb[0].mxu0 %v41
    %v109 = vpop.f32.mrb[0].mxu0
    %v110 = vadd.f32 0.0, %v109
    %v111 = vpop.f32.mrb[0].mxu0
    %112 = vdwg.mxu0
    %113 = vmax.xlane.f32.xlu0 %v110
    %v114 = vpop.xlane.xlu0 %113
    %v115 = vsub.f32 %v110, %v114
    %v116 = vmul.f32 %v115, 1.442695
    %v117 = vpow.pop %v116
    %118 = vadd.xlane.f32.xlu0 %v117
    %v119 = vpop.xlane.xlu0 %118
    %v120 = vrcp.pop %v119
    %v121 = vmul.f32 %v117, %v120
    %vm122 = vcmp.gt.f32.partialorder %v121, 0.015625
    %v123 = vsel %vm122, %v121, 0.0
    %v124 = vmul.f32 %v123, 1.442695
    %v125 = vpow.pop %v124
    %126 = vadd.xlane.f32.xlu0 %v125
    %v127 = vpop.xlane.xlu0 %126
    %v128 = vrcp.pop %v127
    %v129 = vmul.f32 %v125, %v128
    %130 = vmatprep.subr.mxu0 0.0
    %131 = vmatpush1.msra.mxu0 %v19
    %132 = vmatprep.subr.mxu0 0.0
    %133 = vmatpush1.msra.mxu0 %v20
    %134 = vmatprep.subr.mxu0 0.0
    %135 = vmatpush1.msra.mxu0 %v21
    %136 = vmatprep.subr.mxu0 0.0
    %137 = vmatpush1.msra.mxu0 %v22
    %138 = vmatprep.subr.mxu0 0.0
    %139 = vmatpush1.msra.mxu0 %v23
    %140 = vmatprep.subr.mxu0 0.0
    %141 = vmatpush1.msra.mxu0 %v24
    %142 = vmatprep.subr.mxu0 0.0
    %143 = vmatpush1.msra.mxu0 %v25
    %144 = vmatprep.subr.mxu0 0.0
    %145 = vmatpush1.msra.mxu0 %v26
    %146 = vmatprep.subr.mxu0 0.0
    %147 = vmatpush1.msra.mxu0 %v27
    %148 = vmatprep.subr.mxu0 0.0
    %149 = vmatpush1.msra.mxu0 %v28
    %150 = vmatprep.subr.mxu0 0.0
    %151 = vmatpush1.msra.mxu0 %v29
    %152 = vmatprep.subr.mxu0 0.0
    %153 = vmatpush1.msra.mxu0 %v30
    %154 = vmatprep.subr.mxu0 0.0
    %155 = vmatpush1.msra.mxu0 %v31
    %156 = vmatprep.subr.mxu0 0.0
    %157 = vmatpush1.msra.mxu0 %v32
    %158 = vmatprep.subr.mxu0 0.0
    %159 = vmatpush1.msra.mxu0 %v33
    %160 = vmatprep.subr.mxu0 0.0
    %161 = vmatpush1.msra.mxu0 %v34
    %162 = vmatprep.subr.mxu0 0.0
    %163 = vmatpush1.msra.mxu0 0.0
    %164 = vmatprep.subr.mxu0 0.0
    %165 = vmatpush1.msra.mxu0 0.0
    %166 = vmatprep.subr.mxu0 0.0
    %167 = vmatpush1.msra.mxu0 0.0
    %168 = vmatprep.subr.mxu0 0.0
    %169 = vmatpush1.msra.mxu0 0.0
    %170 = vmatprep.subr.mxu0 0.0
    %171 = vmatpush1.msra.mxu0 0.0
    %172 = vmatprep.subr.mxu0 0.0
    %173 = vmatpush1.msra.mxu0 0.0
    %174 = vmatprep.subr.mxu0 0.0
    %175 = vmatpush1.msra.mxu0 0.0
    %176 = vmatprep.subr.mxu0 0.0
    %177 = vmatpush1.msra.mxu0 0.0
    %178 = vmatprep.subr.mxu0 0.0
    %179 = vmatpush1.msra.mxu0 0.0
    %180 = vmatprep.subr.mxu0 0.0
    %181 = vmatpush1.msra.mxu0 0.0
    %182 = vmatprep.subr.mxu0 0.0
    %183 = vmatpush1.msra.mxu0 0.0
    %184 = vmatprep.subr.mxu0 0.0
    %185 = vmatpush1.msra.mxu0 0.0
    %186 = vmatprep.subr.mxu0 0.0
    %187 = vmatpush1.msra.mxu0 0.0
    %188 = vmatprep.subr.mxu0 0.0
    %189 = vmatpush1.msra.mxu0 0.0
    %190 = vmatprep.subr.mxu0 0.0
    %191 = vmatpush1.msra.mxu0 0.0
    %192 = vmatprep.subr.mxu0 0.0
    %193 = vmatpush1.msra.mxu0 0.0
    %194 = vmatprep.mubr.f32.mxu0 0.0
    %195 = vmatmul.mubr.f32.gmra.mrb[0].mxu0 %v129
    %v196 = vpop.f32.mrb[0].mxu0
    %v197 = vadd.f32 0.0, %v196
    %v198 = vpop.f32.mrb[0].mxu0
    %199 = vdwg.mxu0
    %200 = vst [vmem:[#allocation2] sm:$0xff] %v129
    %201 = vst.msk [vmem:[#allocation4] sm:$0xff] %vm39, %v197
    // Predicated region
    $region14: #{mem_module_forward.1} parent=1 // pred_check
      _
    $region15: #{mem_module_forward.1} parent=1 // pred_check_branch
      %203 = sbr.rel (0) target = $region17
    $region16: #{mem_module_forward.1} parent=1 // pred_region
      %s205 = ssub.s32 128, 128
      %206 = vsyncadd [#allocation3], %s205
      %s208 = sshll.u32 [#allocation2], 4
      %s209 = int_to_ptr.vmem [resolvable:$true] %s208
      %211 = dma.vmem_to_hbm [thread:$0]  %s209, 128, %s3, [#allocation3]
    $region17: #{mem_module_forward.1} parent=1 // pred_fallthru
      _
    // Predicated region
    $region18: #{mem_module_forward.1} parent=1 // pred_check
      _
    $region19: #{mem_module_forward.1} parent=1 // pred_check_branch
      %213 = sbr.rel (0) target = $region21
    $region20: #{mem_module_forward.1} parent=1 // pred_region
      %s215 = ssub.s32 128, 128
      %216 = vsyncadd [#allocation5], %s215
      %s218 = sshll.u32 [#allocation4], 4
      %s219 = int_to_ptr.vmem [resolvable:$true] %s218
      %221 = dma.vmem_to_hbm [thread:$0]  %s219, 128, %s4, [#allocation5]
    $region21: #{mem_module_forward.1} parent=1 // pred_fallthru
      _
    // Predicated region
    $region22: #{mem_module_forward.1} parent=1 // pred_check
      _
    $region23: #{mem_module_forward.1} parent=1 // pred_check_branch
      %223 = sbr.rel (0) target = $region25
    $region24: #{mem_module_forward.1} parent=1 // pred_region
      %224 = dma.done [#allocation3], 128
    $region25: #{mem_module_forward.1} parent=1 // pred_fallthru
      _
    // Predicated region
    $region26: #{mem_module_forward.1} parent=1 // pred_check
      _
    $region27: #{mem_module_forward.1} parent=1 // pred_check_branch
      %226 = sbr.rel (0) target = $region29
    $region28: #{mem_module_forward.1} parent=1 // pred_region
      %227 = dma.done [#allocation5], 128
    $region29: #{mem_module_forward.1} parent=1 // pred_fallthru
      _
    %228 = vsyncpa [#allocation3], 1
    %229 = vsyncpa [#allocation5], 1

</llo_original>
